<compile_context>
chip_gen: v7x
topology: tpu7x:2x2x1
jax: 0.10.0
libtpu: 0.0.40
codegen_flags: <defaults>
</compile_context>

<pallas_src>
import functools
import numpy as np
import jax
import jax.numpy as jnp
from jax.experimental import pallas as pl
from jax.experimental.pallas import tpu as pltpu

EMBED = 128
HEADS = 8
HEAD_DIM = EMBED // HEADS
ENC_DEPTH = 4
DEC_DEPTH = 4
MLP_RATIO = 4
HIST_STEPS = 10
FUT_STEPS = 30
MAX_LANE_PRED = 35
LOSS_W = (1.0, 1.0, 0.35)
ACTOR_MASK_RATIO = 0.5
LANE_MASK_RATIO = 0.5
NEG_INF = -1e9

# fused prediction-head column layout (lane-dense, padded to 256)
HEAD_OUT = 256
FUT_OFF = 0                            # 60 cols
HIST_OFF = FUT_STEPS * 2               # 20 cols
LANE_OFF = HIST_OFF + HIST_STEPS * 2   # 70 cols


# --------------------------------------------------------------------------
# Pallas kernels
# --------------------------------------------------------------------------
def _ln(x, w, b, eps=1e-5):
    mu = jnp.mean(x, axis=-1, keepdims=True)
    var = jnp.mean((x - mu) ** 2, axis=-1, keepdims=True)
    return (x - mu) * jax.lax.rsqrt(var + eps) * w + b


# ---- fused LayerNorm + Linear (encoder norm+decoder_embed, dec norm+heads) --
def norm_linear_kernel(x_ref, lnw_ref, lnb_ref, w_ref, b_ref, o_ref):
    h = _ln(x_ref[...], lnw_ref[...], lnb_ref[...])
    o_ref[...] = (
        jnp.dot(h.astype(jnp.bfloat16), w_ref[...], preferred_element_type=jnp.float32)
        + b_ref[...]
    )


def norm_linear(x, lnw, lnb, w, b, row_tile=256):
    """Row-tiled fused LayerNorm + Linear; weights resident, rows pipelined."""
    rows, din = x.shape
    if rows < row_tile:
        row_tile = ((rows + 7) // 8) * 8          # one small lane-aligned tile
    rpad = (-rows) % row_tile
    if rpad:
        x = jnp.pad(x, ((0, rpad), (0, 0)))
    rows_p = rows + rpad
    out = pl.pallas_call(
        norm_linear_kernel,
        grid=(rows_p // row_tile,),
        in_specs=[
            pl.BlockSpec((row_tile, din), lambda r: (r, 0)),
            pl.BlockSpec(lnw.shape, lambda r: (0, 0)),
            pl.BlockSpec(lnb.shape, lambda r: (0, 0)),
            pl.BlockSpec(w.shape, lambda r: (0, 0)),
            pl.BlockSpec(b.shape, lambda r: (0, 0)),
        ],
        out_specs=pl.BlockSpec((row_tile, w.shape[1]), lambda r: (r, 0)),
        out_shape=jax.ShapeDtypeStruct((rows_p, w.shape[1]), jnp.float32),
        compiler_params=pltpu.CompilerParams(dimension_semantics=("parallel",)),
    )(x, lnw, lnb, w, b)
    return out[:rows]


# ---- fused pos_embed + decoder_pos_embed (2x Linear-GELU-Linear, 256 out) ---
def dual_mlp2_kernel(x_ref, w1a, b1a, w2a, b2a, w1b, b1b, w2b, b2b, o_ref):
    # TODO(synk): torch nn.GELU default is exact erf; tanh approximation used.
    xb = x_ref[...].astype(jnp.bfloat16)
    ha = jax.nn.gelu(
        jnp.dot(xb, w1a[...], preferred_element_type=jnp.float32) + b1a[...],
        approximate=True)
    oa = jnp.dot(ha.astype(jnp.bfloat16), w2a[...],
                 preferred_element_type=jnp.float32) + b2a[...]
    hb = jax.nn.gelu(
        jnp.dot(xb, w1b[...], preferred_element_type=jnp.float32) + b1b[...],
        approximate=True)
    ob = jnp.dot(hb.astype(jnp.bfloat16), w2b[...],
                 preferred_element_type=jnp.float32) + b2b[...]
    o_ref[...] = jnp.concatenate([oa, ob], axis=-1)


def dual_pos_embed(x, pa, pb):
    return pl.pallas_call(
        dual_mlp2_kernel,
        out_shape=jax.ShapeDtypeStruct((x.shape[0], 2 * EMBED), jnp.float32),
    )(x, pa["w1"], pa["b1"], pa["w2"], pa["b2"],
      pb["w1"], pb["b1"], pb["w2"], pb["b2"])


# ---- group-batched PointNet embedding (agent / lane encoders) ---------------
def pointnet_kernel(x_ref, w1_ref, b1_ref, w2_ref, b2_ref, o_ref, *,
                    n_steps, n_groups):
    # x_ref: (n_steps * n_groups, C) time-major rows; two bf16 matmuls then a
    # max-pool over the leading time axis (single reshape + axis-0 reduce).
    xb = x_ref[...].astype(jnp.bfloat16)
    h = jnp.dot(xb, w1_ref[...], preferred_element_type=jnp.float32) + b1_ref[...]
    h = jnp.maximum(h, 0.0)
    h = jnp.dot(h.astype(jnp.bfloat16), w2_ref[...],
                preferred_element_type=jnp.float32) + b2_ref[...]
    h3 = h.reshape(n_steps, n_groups, h.shape[-1])
    o_ref[...] = jnp.max(h3, axis=0)


def pointnet_embed(x, p):
    # x: (G, L, Cpad=8) -> (G, EMBED)
    # TODO(synk): pointnet max-pools over all L points incl. padded ones
    # (validity is a feature channel), matching the approximated embedder.
    # TODO(synk): merge the three hist/future/lane calls into one grid kernel.
    g0, l, c = x.shape
    gpad = (-g0) % 8
    if gpad:
        x = jnp.pad(x, ((0, gpad), (0, 0), (0, 0)))
    g = g0 + gpad
    xt = jnp.transpose(x, (1, 0, 2)).reshape(l * g, c)       # time-major rows
    out = pl.pallas_call(
        functools.partial(pointnet_kernel, n_steps=l, n_groups=g),
        out_shape=jax.ShapeDtypeStruct((g, EMBED), jnp.float32),
    )(xt, p["w1"], p["b1"], p["w2"], p["b2"])
    return out[:g0]


# ---- fused transformer stack (4 pre-norm blocks in ONE pallas_call) ---------
def tx_stack_kernel(bias_ref, x_ref, ln1w, ln1b, wqkv, wproj, bproj,
                    ln2w, ln2b, w1, b1, w2, b2, o_ref, *, num_heads):
    layer = pl.program_id(1)

    @pl.when(layer == 0)
    def _():
        o_ref[...] = x_ref[...]

    x = o_ref[0]                                  # (S, D) f32, VMEM-resident
    s_len, d = x.shape
    dh = d // num_heads
    bias = bias_ref[0]                            # (1, S) additive bias (already * -1e9)

    # ---- multi-head self attention (head-batched einsums, bf16 MXU) --------
    # 1/sqrt(dh) is folded into the Q columns of wqkv at init.
    h = _ln(x, ln1w[layer], ln1b[layer])
    qkv = jnp.dot(h.astype(jnp.bfloat16), wqkv[layer],
                  preferred_element_type=jnp.float32)          # (S, 3D) f32
    # lane-aligned 128-wide slices -> (S, H, dh) -> head-major (H, S, dh)
    q3 = pltpu.einshape("shd->hsd", qkv[:, :d].reshape(s_len, num_heads, dh)
                        ).astype(jnp.bfloat16)
    k3 = pltpu.einshape("shd->hsd", qkv[:, d:2 * d].reshape(s_len, num_heads, dh)
                        ).astype(jnp.bfloat16)
    v3 = pltpu.einshape("shd->hsd", qkv[:, 2 * d:].reshape(s_len, num_heads, dh)
                        ).astype(jnp.bfloat16)

    # TODO(synk): for large S, chunk the (H,S,S) scores flash-style over keys.
    s = jnp.einsum("hqd,hkd->hqk", q3, k3,
                   preferred_element_type=jnp.float32) + bias[None]
    s = s - jnp.max(s, axis=-1, keepdims=True)
    p = jnp.exp(s)
    p = p * pl.reciprocal(jnp.sum(p, axis=-1, keepdims=True), approx=True)
    ctx = jnp.einsum("hqk,hkd->hqd", p.astype(jnp.bfloat16), v3,
                     preferred_element_type=jnp.float32)       # (H, S, dh) f32
    attn = pltpu.einshape("hsd->shd", ctx).reshape(s_len, d)   # (S, D)
    attn = jnp.dot(attn.astype(jnp.bfloat16), wproj[layer],
                   preferred_element_type=jnp.float32) + bproj[layer]
    x = x + attn

    # ---- MLP ----
    h2 = _ln(x, ln2w[layer], ln2b[layer])
    m = jnp.dot(h2.astype(jnp.bfloat16), w1[layer],
                preferred_element_type=jnp.float32) + b1[layer]
    m = jax.nn.gelu(m, approximate=True)
    m = jnp.dot(m.astype(jnp.bfloat16), w2[layer],
                preferred_element_type=jnp.float32) + b2[layer]
    o_ref[0] = x + m


def transformer_stack(x, attn_bias_b1s, p, num_heads=HEADS):
    """Run all `depth` blocks in one pallas_call.

    grid = (batch, layer); layer axis is 'arbitrary' with the activation and
    all (depth, ...) weight stacks VMEM-resident (constant block indices), so
    no weight/activation HBM traffic between layers.
    """
    b, s, d = x.shape
    depth = p["wqkv"].shape[0]

    def full_spec(a):
        nd = a.ndim
        return pl.BlockSpec(a.shape, lambda bi, li, _nd=nd: (0,) * _nd)

    # TODO(synk): batch-tile >1 sequence per grid step (fold batch into the
    # head axis) to better fill the MXU when S and B grow.
    kern = functools.partial(tx_stack_kernel, num_heads=num_heads)
    return pl.pallas_call(
        kern,
        grid=(b, depth),
        in_specs=[
            pl.BlockSpec((1, 1, s), lambda bi, li: (bi, 0, 0)),   # additive attn bias
            pl.BlockSpec((1, s, d), lambda bi, li: (bi, 0, 0)),   # input tokens
            full_spec(p["ln1_w"]), full_spec(p["ln1_b"]), full_spec(p["wqkv"]),
            full_spec(p["wproj"]), full_spec(p["bproj"]),
            full_spec(p["ln2_w"]), full_spec(p["ln2_b"]),
            full_spec(p["mlp_w1"]), full_spec(p["mlp_b1"]),
            full_spec(p["mlp_w2"]), full_spec(p["mlp_b2"]),
        ],
        out_specs=pl.BlockSpec((1, s, d), lambda bi, li: (bi, 0, 0)),
        out_shape=jax.ShapeDtypeStruct((b, s, d), jnp.float32),
        compiler_params=pltpu.CompilerParams(
            dimension_semantics=("parallel", "arbitrary"),
            vmem_limit_bytes=48 * 1024 * 1024),
    )(attn_bias_b1s, x, p["ln1_w"], p["ln1_b"], p["wqkv"], p["wproj"], p["bproj"],
      p["ln2_w"], p["ln2_b"], p["mlp_w1"], p["mlp_b1"], p["mlp_w2"], p["mlp_b2"])


# --------------------------------------------------------------------------
# Parameters (deterministic synthetic init; matmul weights stored in bf16)
# --------------------------------------------------------------------------
def init_params(key):
    keys = iter(jax.random.split(key, 64))
    nk = lambda: next(keys)

    def pointnet(hidden=128):                      # lane-dense hidden width
        return dict(
            w1=(jax.random.normal(nk(), (8, hidden), jnp.float32) * 0.2
                ).astype(jnp.bfloat16),
            b1=jnp.zeros((1, hidden), jnp.float32),
            w2=(jax.random.normal(nk(), (hidden, EMBED), jnp.float32)
                * (hidden ** -0.5)).astype(jnp.bfloat16),
            b2=jnp.zeros((1, EMBED), jnp.float32),
        )

    def mlp2_params(din=8):
        return dict(
            w1=(jax.random.normal(nk(), (din, EMBED), jnp.float32)
                * (din ** -0.5)).astype(jnp.bfloat16),
            b1=jnp.zeros((1, EMBED), jnp.float32),
            w2=(jax.random.normal(nk(), (EMBED, EMBED), jnp.float32)
                * (EMBED ** -0.5)).astype(jnp.bfloat16),
            b2=jnp.zeros((1, EMBED), jnp.float32),
        )

    def block_stack(depth):
        hid = EMBED * MLP_RATIO
        wqkv = jax.random.normal(nk(), (depth, EMBED, 3 * EMBED), jnp.float32) * (EMBED ** -0.5)
        # fold the 1/sqrt(dh) attention scale into the Q columns
        wqkv = wqkv.at[:, :, :EMBED].multiply(HEAD_DIM ** -0.5)
        return dict(
            ln1_w=jnp.ones((depth, 1, EMBED), jnp.float32),
            ln1_b=jnp.zeros((depth, 1, EMBED), jnp.float32),
            wqkv=wqkv.astype(jnp.bfloat16),
            wproj=(jax.random.normal(nk(), (depth, EMBED, EMBED), jnp.float32)
                   * (EMBED ** -0.5)).astype(jnp.bfloat16),
            bproj=jnp.zeros((depth, 1, EMBED), jnp.float32),
            ln2_w=jnp.ones((depth, 1, EMBED), jnp.float32),
            ln2_b=jnp.zeros((depth, 1, EMBED), jnp.float32),
            mlp_w1=(jax.random.normal(nk(), (depth, EMBED, hid), jnp.float32)
                    * (EMBED ** -0.5)).astype(jnp.bfloat16),
            mlp_b1=jnp.zeros((depth, 1, hid), jnp.float32),
            mlp_w2=(jax.random.normal(nk(), (depth, hid, EMBED), jnp.float32)
                    * (hid ** -0.5)).astype(jnp.bfloat16),
            mlp_b2=jnp.zeros((depth, 1, EMBED), jnp.float32),
        )

    # fused prediction heads: [future 60 | history 20 | lane 70 | zero pad] = 256
    w_fut = jax.random.normal(nk(), (EMBED, FUT_STEPS * 2), jnp.float32) * (EMBED ** -0.5)
    w_hist = jax.random.normal(nk(), (EMBED, HIST_STEPS * 2), jnp.float32) * (EMBED ** -0.5)
    w_lane = jax.random.normal(nk(), (EMBED, MAX_LANE_PRED * 2), jnp.float32) * (EMBED ** -0.5)
    w_heads = jnp.concatenate([w_fut, w_hist, w_lane], axis=1)
    w_heads = jnp.pad(w_heads, ((0, 0), (0, HEAD_OUT - w_heads.shape[1]))).astype(jnp.bfloat16)

    return dict(
        hist_embed=pointnet(), future_embed=pointnet(), lane_embed=pointnet(),
        pos_embed=mlp2_params(8), decoder_pos_embed=mlp2_params(8),
        encoder=block_stack(ENC_DEPTH), decoder=block_stack(DEC_DEPTH),
        norm_w=jnp.ones((1, EMBED), jnp.float32), norm_b=jnp.zeros((1, EMBED), jnp.float32),
        dec_norm_w=jnp.ones((1, EMBED), jnp.float32), dec_norm_b=jnp.zeros((1, EMBED), jnp.float32),
        decoder_embed_w=(jax.random.normal(nk(), (EMBED, EMBED), jnp.float32)
                         * (EMBED ** -0.5)).astype(jnp.bfloat16),
        decoder_embed_b=jnp.zeros((1, EMBED), jnp.float32),
        actor_type_embed=jax.random.normal(nk(), (16, EMBED), jnp.float32) * 0.02,
        lane_type_embed=jax.random.normal(nk(), (1, 1, EMBED), jnp.float32) * 0.02,
        lane_mask_token=jax.random.normal(nk(), (1, 1, EMBED), jnp.float32) * 0.02,
        future_mask_token=jax.random.normal(nk(), (1, 1, EMBED), jnp.float32) * 0.02,
        history_mask_token=jax.random.normal(nk(), (1, 1, EMBED), jnp.float32) * 0.02,
        head_w=w_heads, head_b=jnp.zeros((1, HEAD_OUT), jnp.float32),
    )


# --------------------------------------------------------------------------
# Host-side random masking (data-dependent shapes -> numpy glue)
# --------------------------------------------------------------------------
def agent_random_masking_np(future_padding_mask, num_actors, mask_ratio, rng):
    B, N, _ = future_padding_mask.shape
    pred_masks = ~future_padding_mask.all(-1)               # (B, N)
    fut_num_tokens = pred_masks.sum(-1)
    len_keeps = (fut_num_tokens * (1 - mask_ratio)).astype(np.int64)
    agent_ids = np.arange(N)
    hist_keep_ids, fut_keep_ids = [], []
    for i in range(B):
        pred_agent_ids = agent_ids[pred_masks[i]]
        noise = rng.random(int(fut_num_tokens[i]))
        ids_shuffle = np.argsort(noise)
        f_keep = pred_agent_ids[ids_shuffle[: int(len_keeps[i])]]
        fut_keep_ids.append(f_keep)
        hist_keep_mask = np.zeros(N, dtype=bool)
        hist_keep_mask[: int(num_actors[i])] = True
        hist_keep_mask[f_keep] = False
        hist_keep_ids.append(agent_ids[hist_keep_mask])
    return hist_keep_ids, fut_keep_ids


def lane_random_masking_np(key_padding_mask, mask_ratio, rng):
    B = key_padding_mask.shape[0]
    num_tokens = (~key_padding_mask).sum(1)
    len_keeps = np.ceil(num_tokens * (1 - mask_ratio)).astype(np.int64)
    ids_keep_list = []
    for i in range(B):
        noise = rng.random(int(num_tokens[i]))
        ids_shuffle = np.argsort(noise)
        ids_keep_list.append(ids_shuffle[: int(len_keeps[i])])
    return ids_keep_list


def pad_gather(tokens, ids_list):
    """Gather per-batch variable-length token sets, pad to max len."""
    B, _, D = tokens.shape
    Lmax = max(1, max(len(ids) for ids in ids_list))
    rows, masks = [], []
    for i, ids in enumerate(ids_list):
        n = len(ids)
        if n:
            t = tokens[i, np.asarray(ids, dtype=np.int32)]
        else:
            t = jnp.zeros((0, D), tokens.dtype)
        rows.append(jnp.pad(t, ((0, Lmax - n), (0, 0))))
        masks.append(np.concatenate([np.zeros(n), np.ones(Lmax - n)]).astype(np.float32))
    return jnp.stack(rows), np.stack(masks)


# --------------------------------------------------------------------------
# Loss helpers
# --------------------------------------------------------------------------
def masked_l1(pred, tgt, mask):
    m = jnp.asarray(mask, jnp.float32)[..., None]
    num = jnp.sum(jnp.abs(pred - tgt) * m)
    den = jnp.maximum(jnp.sum(m) * pred.shape[-1], 1.0)
    return num / den


def masked_mse(pred, tgt, mask):
    m = jnp.asarray(mask, jnp.float32)[..., None]
    num = jnp.sum(((pred - tgt) ** 2) * m)
    den = jnp.maximum(jnp.sum(m) * pred.shape[-1], 1.0)
    return num / den


def _pad_ch(x, to=8):
    return jnp.pad(x, [(0, 0)] * (x.ndim - 1) + [(0, to - x.shape[-1])])


# --------------------------------------------------------------------------
# ModelMAE forward
# --------------------------------------------------------------------------
def model_mae_forward(params, data, rng):
    B, N, _, _ = data["x"].shape
    M = data["lane_positions"].shape[1]
    L = data["lane_positions"].shape[2]

    x_pad = np.asarray(data["x_padding_mask"])
    hist_padding_mask = x_pad[:, :, :HIST_STEPS]
    future_padding_mask = x_pad[:, :, HIST_STEPS:]

    # ---- history / future / lane embeddings (group-batched pointnet kernels) ----
    hist_feat = jnp.concatenate(
        [jnp.asarray(data["x"], jnp.float32),
         jnp.asarray(data["x_velocity_diff"], jnp.float32)[..., None],
         jnp.asarray(~hist_padding_mask, jnp.float32)[..., None]], axis=-1)
    hist_feat = _pad_ch(hist_feat.reshape(B * N, HIST_STEPS, 4))
    hist_feat = pointnet_embed(hist_feat, params["hist_embed"]).reshape(B, N, EMBED)

    future_feat = jnp.concatenate(
        [jnp.asarray(data["y"], jnp.float32),
         jnp.asarray(~future_padding_mask, jnp.float32)[..., None]], axis=-1)
    future_feat = _pad_ch(future_feat.reshape(B * N, FUT_STEPS, 3))
    future_feat = pointnet_embed(future_feat, params["future_embed"]).reshape(B, N, EMBED)

    lane_padding_mask = np.asarray(data["lane_padding_mask"])
    lane_normalized = (jnp.asarray(data["lane_positions"], jnp.float32)
                       - jnp.asarray(data["lane_centers"], jnp.float32)[:, :, None, :])
    lane_feat = jnp.concatenate(
        [lane_normalized, jnp.asarray(~lane_padding_mask, jnp.float32)[..., None]], axis=-1)
    lane_feat = _pad_ch(lane_feat.reshape(B * M, L, 3))
    lane_feat = pointnet_embed(lane_feat, params["lane_embed"]).reshape(B, M, EMBED)

    # ---- type + positional embeddings ----
    actor_type_idx = np.asarray(data["x_attr"])[..., 0].astype(np.int32)
    actor_type_embed = params["actor_type_embed"][actor_type_idx]
    hist_feat = hist_feat + actor_type_embed
    lane_feat = lane_feat + params["lane_type_embed"]
    future_feat = future_feat + actor_type_embed

    x_centers = jnp.asarray(data["x_centers"], jnp.float32)
    lane_centers = jnp.asarray(data["lane_centers"], jnp.float32)
    centers = jnp.concatenate([x_centers, x_centers, lane_centers], axis=1)
    ang9 = jnp.asarray(data["x_angles"], jnp.float32)[..., 9]
    angles = jnp.concatenate([ang9, ang9, jnp.asarray(data["lane_angles"], jnp.float32)], axis=1)
    x_ang = jnp.stack([jnp.cos(angles), jnp.sin(angles)], axis=-1)
    pos_feat = jnp.concatenate([centers, x_ang], axis=-1)            # (B, 2N+M, 4)
    S_all = pos_feat.shape[1]
    pos_feat_p = _pad_ch(pos_feat).reshape(B * S_all, 8)

    # encoder + decoder pos-embed MLPs in ONE kernel (lane-dense 256-wide out)
    pos_both = dual_pos_embed(pos_feat_p, params["pos_embed"], params["decoder_pos_embed"])
    pos_embed = pos_both[:, :EMBED].reshape(B, S_all, EMBED)
    dec_pos = pos_both[:, EMBED:].reshape(B, S_all, EMBED)

    hist_feat = hist_feat + pos_embed[:, :N]
    lane_feat = lane_feat + pos_embed[:, -M:]
    future_feat = future_feat + pos_embed[:, N:2 * N]

    # ---- random masking (host side, data-dependent shapes) ----
    # TODO(synk): random masking / pad_sequence gather has data-dependent
    # shapes and stays on the host (numpy), matching the torch loop semantics.
    num_actors = np.asarray(data["num_actors"])
    hist_keep_ids, fut_keep_ids = agent_random_masking_np(
        future_padding_mask, num_actors, ACTOR_MASK_RATIO, rng)
    hist_masked, hist_kpm = pad_gather(hist_feat, hist_keep_ids)
    fut_masked, fut_kpm = pad_gather(future_feat, fut_keep_ids)

    lane_kpm_in = np.asarray(data["lane_key_padding_mask"])
    lane_keep_ids = lane_random_masking_np(lane_kpm_in, LANE_MASK_RATIO, rng)
    lane_masked, lane_kpm = pad_gather(lane_feat, lane_keep_ids)

    x_enc = jnp.concatenate([hist_masked, fut_masked, lane_masked], axis=1)
    kpm = np.concatenate([hist_kpm, fut_kpm, lane_kpm], axis=1)      # (B, S) 1.0 == padded
    enc_bias = jnp.asarray(kpm, jnp.float32)[:, None, :] * NEG_INF   # precomputed additive bias

    # ---- encoder: 4 blocks fused in one pallas_call ----
    x_enc = transformer_stack(x_enc, enc_bias, params["encoder"])
    Bs, S, _ = x_enc.shape

    # ---- fused final-norm + decoder_embed (row-tiled) ----
    x_dec = norm_linear(x_enc.reshape(Bs * S, EMBED),
                        params["norm_w"], params["norm_b"],
                        params["decoder_embed_w"], params["decoder_embed_b"])
    x_dec = x_dec.reshape(Bs, S, EMBED)

    Nh, Nf, Nl = hist_masked.shape[1], fut_masked.shape[1], lane_masked.shape[1]
    hist_tokens = x_dec[:, :Nh]
    fut_tokens = x_dec[:, Nh:Nh + Nf]
    lane_tokens = x_dec[:, -Nl:]

    # ---- token reassembly (host-side scatter, data-dependent) ----
    x_key_padding_mask = np.asarray(data["x_key_padding_mask"])
    decoder_hist_token = jnp.tile(params["history_mask_token"], (B, N, 1))
    hist_pred_mask = ~x_key_padding_mask.copy()
    for i, idx in enumerate(hist_keep_ids):
        if len(idx):
            decoder_hist_token = decoder_hist_token.at[i, np.asarray(idx)].set(
                hist_tokens[i, : len(idx)])
            hist_pred_mask[i, idx] = False

    decoder_fut_token = jnp.tile(params["future_mask_token"], (B, N, 1))
    future_pred_mask = ~x_key_padding_mask.copy()
    for i, idx in enumerate(fut_keep_ids):
        if len(idx):
            decoder_fut_token = decoder_fut_token.at[i, np.asarray(idx)].set(
                fut_tokens[i, : len(idx)])
            future_pred_mask[i, idx] = False

    decoder_lane_token = jnp.tile(params["lane_mask_token"], (B, M, 1))
    lane_pred_mask = ~lane_kpm_in.copy()
    for i, idx in enumerate(lane_keep_ids):
        if len(idx):
            decoder_lane_token = decoder_lane_token.at[i, np.asarray(idx)].set(
                lane_tokens[i, : len(idx)])
            lane_pred_mask[i, idx] = False

    x_decoder = jnp.concatenate(
        [decoder_hist_token, decoder_fut_token, decoder_lane_token], axis=1)
    x_decoder = x_decoder + dec_pos

    dec_kpm = np.concatenate(
        [x_key_padding_mask, future_padding_mask.all(-1), lane_kpm_in], axis=1
    ).astype(np.float32)
    dec_bias = jnp.asarray(dec_kpm)[:, None, :] * NEG_INF

    # ---- decoder: 4 blocks fused in one pallas_call ----
    x_decoder = transformer_stack(x_decoder, dec_bias, params["decoder"])

    # ---- fused decoder-norm + all three prediction heads (256-wide output) --
    head_out = norm_linear(x_decoder.reshape(B * S_all, EMBED),
                           params["dec_norm_w"], params["dec_norm_b"],
                           params["head_w"], params["head_b"]).reshape(B, S_all, HEAD_OUT)

    assert L <= MAX_LANE_PRED
    lane_pred = head_out[:, -M:, LANE_OFF:LANE_OFF + L * 2].reshape(B, M, L, 2)
    lane_reg_mask = (~lane_padding_mask) & lane_pred_mask[..., None]
    lane_pred_loss = masked_mse(lane_pred, lane_normalized, lane_reg_mask)

    x_hat = head_out[:, :N, HIST_OFF:HIST_OFF + HIST_STEPS * 2].reshape(-1, HIST_STEPS, 2)
    x_tgt = (jnp.asarray(data["x_positions"], jnp.float32)
             - x_centers[:, :, None, :]).reshape(-1, HIST_STEPS, 2)
    x_reg_mask = ((~hist_padding_mask) & hist_pred_mask[..., None]).reshape(-1, HIST_STEPS)
    hist_loss = masked_l1(x_hat, x_tgt, x_reg_mask)

    y_hat = head_out[:, N:2 * N, FUT_OFF:FUT_OFF + FUT_STEPS * 2].reshape(-1, FUT_STEPS, 2)
    y_tgt = jnp.asarray(data["y"], jnp.float32).reshape(-1, FUT_STEPS, 2)
    reg_mask = ((~future_padding_mask) & future_pred_mask[..., None]).reshape(-1, FUT_STEPS)
    future_loss = masked_l1(y_hat, y_tgt, reg_mask)

    loss = LOSS_W[0] * future_loss + LOSS_W[1] * hist_loss + LOSS_W[2] * lane_pred_loss
    return {
        "loss": loss,
        "hist_loss": hist_loss,
        "future_loss": future_loss,
        "lane_pred_loss": lane_pred_loss,
        "x_hat": x_hat.reshape(B, N, HIST_STEPS, 2),
        "y_hat": y_hat.reshape(1, B, N, FUT_STEPS, 2),
        "lane_hat": lane_pred,
        "lane_keep_ids": lane_keep_ids,
        "hist_keep_ids": hist_keep_ids,
        "fut_keep_ids": fut_keep_ids,
    }


# --------------------------------------------------------------------------
if __name__ == "__main__":
    B, N, M, L = 2, 4, 6, 20
    key = jax.random.PRNGKey(0)
    ks = jax.random.split(key, 16)

    data = {
        "x": np.asarray(jax.random.normal(ks[0], (B, N, HIST_STEPS, 2))),
        "x_velocity_diff": np.asarray(jax.random.normal(ks[1], (B, N, HIST_STEPS))),
        "x_padding_mask": np.zeros((B, N, HIST_STEPS + FUT_STEPS), dtype=bool),
        "y": np.asarray(jax.random.normal(ks[2], (B, N, FUT_STEPS, 2))),
        "lane_positions": np.asarray(jax.random.normal(ks[3], (B, M, L, 2)) * 5.0),
        "lane_centers": np.asarray(jax.random.normal(ks[4], (B, M, 2)) * 5.0),
        "lane_padding_mask": np.zeros((B, M, L), dtype=bool),
        "x_attr": np.asarray(jax.random.randint(ks[5], (B, N, 3), 0, 16)),
        "x_centers": np.asarray(jax.random.normal(ks[6], (B, N, 2)) * 5.0),
        "x_angles": np.asarray(jax.random.uniform(ks[7], (B, N, HIST_STEPS + FUT_STEPS),
                                                  minval=-3.14, maxval=3.14)),
        "lane_angles": np.asarray(jax.random.uniform(ks[8], (B, M), minval=-3.14, maxval=3.14)),
        "num_actors": np.full((B,), N, dtype=np.int64),
        "x_key_padding_mask": np.zeros((B, N), dtype=bool),
        "lane_key_padding_mask": np.zeros((B, M), dtype=bool),
        "x_positions": np.asarray(jax.random.normal(ks[9], (B, N, HIST_STEPS, 2)) * 5.0),
    }

    params = init_params(jax.random.PRNGKey(42))
    rng = np.random.default_rng(0)

    out = model_mae_forward(params, data, rng)
    jax.block_until_ready(out["loss"])
    assert np.isfinite(float(out["loss"]))
    print("KERNEL_OK")
</pallas_src>

<mosaic_0001>
module attributes {stable_mosaic.version = 11 : i64} {
  func.func @pointnet_kernel(%arg0: memref<80x8xf32, #tpu.memory_space<vmem>>, %arg1: memref<8x128xbf16, #tpu.memory_space<vmem>>, %arg2: memref<1x128xf32, #tpu.memory_space<vmem>>, %arg3: memref<128x128xbf16, #tpu.memory_space<vmem>>, %arg4: memref<1x128xf32, #tpu.memory_space<vmem>>, %arg5: memref<8x128xf32, #tpu.memory_space<vmem>>) attributes {dimension_semantics = [], scalar_prefetch = 0 : i64, scratch_operands = 0 : i64, tpu.core_type = #tpu.core_type<tc>} {
    %c0 = arith.constant 0 : index
    %c0_0 = arith.constant 0 : index
    %0 = vector.load %arg0[%c0, %c0_0] : memref<80x8xf32, #tpu.memory_space<vmem>>, vector<80x8xf32>
    %1 = arith.truncf %0 : vector<80x8xf32> to vector<80x8xbf16>
    %c0_1 = arith.constant 0 : index
    %c0_2 = arith.constant 0 : index
    %2 = vector.load %arg1[%c0_1, %c0_2] : memref<8x128xbf16, #tpu.memory_space<vmem>>, vector<8x128xbf16>
    %cst = arith.constant dense<0.000000e+00> : vector<80x128xf32>
    %3 = tpu.matmul %1, %2, %cst {dimension_numbers = #tpu.dot_dimension_numbers<[1], [0], [0], [1], [0, 0, 1, 1], [], []>} : vector<80x8xbf16>, vector<8x128xbf16>, vector<80x128xf32> -> vector<80x128xf32>
    %c0_3 = arith.constant 0 : index
    %c0_4 = arith.constant 0 : index
    %4 = vector.load %arg2[%c0_3, %c0_4] : memref<1x128xf32, #tpu.memory_space<vmem>>, vector<1x128xf32>
    %5 = vector.broadcast %4 : vector<1x128xf32> to vector<80x128xf32>
    %6 = arith.addf %3, %5 : vector<80x128xf32>
    %cst_5 = arith.constant 0.000000e+00 : f32
    %7 = vector.broadcast %cst_5 : f32 to vector<80x128xf32>
    %8 = arith.maximumf %6, %7 : vector<80x128xf32>
    %9 = arith.truncf %8 : vector<80x128xf32> to vector<80x128xbf16>
    %c0_6 = arith.constant 0 : index
    %c0_7 = arith.constant 0 : index
    %10 = vector.load %arg3[%c0_6, %c0_7] : memref<128x128xbf16, #tpu.memory_space<vmem>>, vector<128x128xbf16>
    %cst_8 = arith.constant dense<0.000000e+00> : vector<80x128xf32>
    %11 = tpu.matmul %9, %10, %cst_8 {dimension_numbers = #tpu.dot_dimension_numbers<[1], [0], [0], [1], [0, 0, 1, 1], [], []>} : vector<80x128xbf16>, vector<128x128xbf16>, vector<80x128xf32> -> vector<80x128xf32>
    %c0_9 = arith.constant 0 : index
    %c0_10 = arith.constant 0 : index
    %12 = vector.load %arg4[%c0_9, %c0_10] : memref<1x128xf32, #tpu.memory_space<vmem>>, vector<1x128xf32>
    %13 = vector.broadcast %12 : vector<1x128xf32> to vector<80x128xf32>
    %14 = arith.addf %11, %13 : vector<80x128xf32>
    %15 = vector.shape_cast %14 : vector<80x128xf32> to vector<10x8x128xf32>
    %cst_11 = arith.constant dense<0xFF800000> : vector<8x128xf32>
    %16 = vector.multi_reduction <maximumf>, %15, %cst_11 [0] : vector<10x8x128xf32> to vector<8x128xf32>
    %c0_12 = arith.constant 0 : index
    %c0_13 = arith.constant 0 : index
    %17 = vector.load %arg5[%c0_12, %c0_13] : memref<8x128xf32, #tpu.memory_space<vmem>>, vector<8x128xf32>
    tpu.vector_store %arg5[%c0_12, %c0_13], %16 {strides = array<i32>} : memref<8x128xf32, #tpu.memory_space<vmem>>, vector<8x128xf32>,
    return
  }
}

</mosaic_0001>

<llo_original>
// kernel: tpu_custom_call.1
$region0: #{tpu_custom_call.1}
  #allocation0 [shape = 'u32[]', space=smem, size = 0x4, offset = 0x4, fixed_abs, tag = 'smem constant byte address 0x4 - core index']
  #allocation1 [shape = 'u32[144,128]{1,0:T(1,128)}', space=vmem, size = 0x12000, scoped, tag = 'internal scratch']
  %s0 = inlined_call_operand.vmem [shape: f32[80,8], index: 0, kind: input, shape index: {}]
  %s1 = inlined_call_operand.vmem [shape: bf16[8,128], index: 1, kind: input, shape index: {}]
  %s2 = inlined_call_operand.vmem [shape: f32[1,128], index: 2, kind: input, shape index: {}]
  %s3 = inlined_call_operand.vmem [shape: bf16[128,128], index: 3, kind: input, shape index: {}]
  %s4 = inlined_call_operand.vmem [shape: f32[1,128], index: 4, kind: input, shape index: {}]
  %s5 = inlined_call_operand.hbm [shape: f32[8,128], index: 5, kind: output, shape index: {}]
  %s6 = sld [smem:[#allocation0]]
  $region30: #{tpu_custom_call.1} parent=0
    _
  %s8 = ssub.s32 1, %s6
  %s9 = scalar_select 0, %s8, %s6
  $region1: #{tpu_custom_call.1} parent=0
    #allocation2 [shape = 'u8[4096]{0}', space=vmem, size = 0x1000, scoped, tag = 'output window, operand 0, single buffered']
    #allocation3 [shape = 's32[1]{0}', space=sflag, size = 0x4, scoped, tag = 'scoped memory for tpu_custom_call.1']
    %10 = vsyncpa [#allocation3], 0
    // Predicated region
    $region2: #{tpu_custom_call.1} parent=1 // pred_check
      _
    $region3: #{tpu_custom_call.1} parent=1 // pred_check_branch
      %12 = sbr.rel (0) target = $region5
    $region4: #{tpu_custom_call.1} parent=1 // pred_region
      _
    $region5: #{tpu_custom_call.1} parent=1 // pred_fallthru
      _
    // Predicated region
    $region6: #{tpu_custom_call.1} parent=1 // pred_check
      _
    $region7: #{tpu_custom_call.1} parent=1 // pred_check_branch
      %14 = sbr.rel (0) target = $region9
    $region8: #{tpu_custom_call.1} parent=1 // pred_region
      _
    $region9: #{tpu_custom_call.1} parent=1 // pred_fallthru
      _
    // Predicated region
    $region10: #{tpu_custom_call.1} parent=1 // pred_check
      _
    $region11: #{tpu_custom_call.1} parent=1 // pred_check_branch
      %16 = sbr.rel (0) target = $region13
    $region12: #{tpu_custom_call.1} parent=1 // pred_region
      _
    $region13: #{tpu_custom_call.1} parent=1 // pred_fallthru
      _
    // Predicated region
    $region14: #{tpu_custom_call.1} parent=1 // pred_check
      _
    $region15: #{tpu_custom_call.1} parent=1 // pred_check_branch
      %18 = sbr.rel (0) target = $region17
    $region16: #{tpu_custom_call.1} parent=1 // pred_region
      _
    $region17: #{tpu_custom_call.1} parent=1 // pred_fallthru
      _
    // Predicated region
    $region18: #{tpu_custom_call.1} parent=1 // pred_check
      _
    $region19: #{tpu_custom_call.1} parent=1 // pred_check_branch
      %20 = sbr.rel (0) target = $region21
    $region20: #{tpu_custom_call.1} parent=1 // pred_region
      _
    $region21: #{tpu_custom_call.1} parent=1 // pred_fallthru
      _
    %v22 = vld [vmem:[%s0] sm:$0xff]
    %v23 = vld [vmem:[%s0 + $0x8] sm:$0xff]
    %v24 = vld [vmem:[%s0 + $0x10] sm:$0xff]
    %v25 = vld [vmem:[%s0 + $0x18] sm:$0xff]
    %v26 = vld [vmem:[%s0 + $0x20] sm:$0xff]
    %v27 = vld [vmem:[%s0 + $0x28] sm:$0xff]
    %v28 = vld [vmem:[%s0 + $0x30] sm:$0xff]
    %v29 = vld [vmem:[%s0 + $0x38] sm:$0xff]
    %v30 = vld [vmem:[%s0 + $0x40] sm:$0xff]
    %v31 = vld [vmem:[%s0 + $0x48] sm:$0xff]
    %v32 = vpack.c.bf16 %v23, %v22
    %v33 = vpack.c.bf16 %v25, %v24
    %v34 = vpack.c.bf16 %v27, %v26
    %v35 = vpack.c.bf16 %v29, %v28
    %v36 = vpack.c.bf16 %v31, %v30
    %v37 = vld [vmem:[%s1] sm:$0xf]
    %v38 = vld [vmem:[%s2] sm:$0x1]
    %v40 = vlaneseq
    %v41 = vshrl.u32 %v40, 7
    %v42 = vsub.s32 0, %v41
    %v43 = vrot.slane %v38, %v42
    %vm45 = vcmask 64512
    %v47 = vsel %vm45, %v32, 0
    %v50 = vsel %vm45, %v33, 0
    %v53 = vsel %vm45, %v34, 0
    %v56 = vsel %vm45, %v35, 0
    %v59 = vsel %vm45, %v36, 0
    %vm61 = vcmask 1043456
    %v63 = vsel %vm61, %v37, 0
    %65 = vmatprep.subr.bf16.mxu0 0
    %66 = vmatpush1.bf16.msra.mxu0 %v63
    %67 = vmatprep.subr.bf16.mxu0 0
    %68 = vmatpush1.bf16.msra.mxu0 0
    %69 = vmatprep.subr.bf16.mxu0 0
    %70 = vmatpush1.bf16.msra.mxu0 0
    %71 = vmatprep.subr.bf16.mxu0 0
    %72 = vmatpush1.bf16.msra.mxu0 0
    %73 = vmatprep.subr.bf16.mxu0 0
    %74 = vmatpush1.bf16.msra.mxu0 0
    %75 = vmatprep.subr.bf16.mxu0 0
    %76 = vmatpush1.bf16.msra.mxu0 0
    %77 = vmatprep.subr.bf16.mxu0 0
    %78 = vmatpush1.bf16.msra.mxu0 0
    %79 = vmatprep.subr.bf16.mxu0 0
    %80 = vmatpush1.bf16.msra.mxu0 0
    %81 = vmatprep.subr.bf16.mxu0 0
    %82 = vmatpush1.bf16.msra.mxu0 0
    %83 = vmatprep.subr.bf16.mxu0 0
    %84 = vmatpush1.bf16.msra.mxu0 0
    %85 = vmatprep.subr.bf16.mxu0 0
    %86 = vmatpush1.bf16.msra.mxu0 0
    %87 = vmatprep.subr.bf16.mxu0 0
    %88 = vmatpush1.bf16.msra.mxu0 0
    %89 = vmatprep.subr.bf16.mxu0 0
    %90 = vmatpush1.bf16.msra.mxu0 0
    %91 = vmatprep.subr.bf16.mxu0 0
    %92 = vmatpush1.bf16.msra.mxu0 0
    %93 = vmatprep.subr.bf16.mxu0 0
    %94 = vmatpush1.bf16.msra.mxu0 0
    %95 = vmatprep.subr.bf16.mxu0 0
    %96 = vmatpush1.bf16.msra.mxu0 0
    %97 = vmatprep.mubr.bf16.mxu0 0
    %98 = vmatmul.mubr.bf16.gmra.mrb[0].mxu0 %v47
    %v99 = vpop.f32.mrb[0].mxu0
    %v100 = vadd.f32 %v43, %v99
    %v101 = vpop.f32.mrb[0].mxu0
    %v102 = vpop.f32.mrb[0].mxu0
    %v103 = vadd.f32 %v43, %v102
    %v104 = vpop.f32.mrb[0].mxu0
    %105 = vmatprep.mubr.bf16.mxu0 0
    %106 = vmatmul.mubr.bf16.gmra.mrb[0].mxu0 %v50
    %v107 = vpop.f32.mrb[0].mxu0
    %v108 = vadd.f32 %v43, %v107
    %v109 = vpop.f32.mrb[0].mxu0
    %v110 = vpop.f32.mrb[0].mxu0
    %v111 = vadd.f32 %v43, %v110
    %v112 = vpop.f32.mrb[0].mxu0
    %113 = vmatprep.mubr.bf16.mxu0 0
    %114 = vmatmul.mubr.bf16.gmra.mrb[0].mxu0 %v53
    %v115 = vpop.f32.mrb[0].mxu0
    %v116 = vadd.f32 %v43, %v115
    %v117 = vpop.f32.mrb[0].mxu0
    %v118 = vpop.f32.mrb[0].mxu0
    %v119 = vadd.f32 %v43, %v118
    %v120 = vpop.f32.mrb[0].mxu0
    %121 = vmatprep.mubr.bf16.mxu0 0
    %122 = vmatmul.mubr.bf16.gmra.mrb[0].mxu0 %v56
    %v123 = vpop.f32.mrb[0].mxu0
    %v124 = vadd.f32 %v43, %v123
    %v125 = vpop.f32.mrb[0].mxu0
    %v126 = vpop.f32.mrb[0].mxu0
    %v127 = vadd.f32 %v43, %v126
    %v128 = vpop.f32.mrb[0].mxu0
    %129 = vmatprep.mubr.bf16.mxu0 0
    %130 = vmatmul.mubr.bf16.gmra.mrb[0].mxu0 %v59
    %v131 = vpop.f32.mrb[0].mxu0
    %v132 = vadd.f32 %v43, %v131
    %v133 = vpop.f32.mrb[0].mxu0
    %v134 = vpop.f32.mrb[0].mxu0
    %v135 = vadd.f32 %v43, %v134
    %v136 = vpop.f32.mrb[0].mxu0
    %137 = vdwg.mxu0
    %v138 = vmax.f32 %v100, 0.0
    %v139 = vmax.f32 %v103, 0.0
    %v140 = vmax.f32 %v108, 0.0
    %v141 = vmax.f32 %v111, 0.0
    %v142 = vmax.f32 %v116, 0.0
    %v143 = vmax.f32 %v119, 0.0
    %v144 = vmax.f32 %v124, 0.0
    %v145 = vmax.f32 %v127, 0.0
    %v146 = vmax.f32 %v132, 0.0
    %v147 = vmax.f32 %v135, 0.0
    %v148 = vpack.c.bf16 %v139, %v138
    %v149 = vpack.c.bf16 %v141, %v140
    %v150 = vpack.c.bf16 %v143, %v142
    %v151 = vpack.c.bf16 %v145, %v144
    %v152 = vpack.c.bf16 %v147, %v146
    %v153 = vld [vmem:[%s3] sm:$0xf]
    %v154 = vld [vmem:[%s3 + $0x4] sm:$0xf]
    %v155 = vld [vmem:[%s3 + $0x8] sm:$0xf]
    %v156 = vld [vmem:[%s3 + $0xc] sm:$0xf]
    %v157 = vld [vmem:[%s3 + $0x10] sm:$0xf]
    %v158 = vld [vmem:[%s3 + $0x14] sm:$0xf]
    %v159 = vld [vmem:[%s3 + $0x18] sm:$0xf]
    %v160 = vld [vmem:[%s3 + $0x1c] sm:$0xf]
    %v161 = vld [vmem:[%s3 + $0x20] sm:$0xf]
    %v162 = vld [vmem:[%s3 + $0x24] sm:$0xf]
    %v163 = vld [vmem:[%s3 + $0x28] sm:$0xf]
    %v164 = vld [vmem:[%s3 + $0x2c] sm:$0xf]
    %v165 = vld [vmem:[%s3 + $0x30] sm:$0xf]
    %v166 = vld [vmem:[%s3 + $0x34] sm:$0xf]
    %v167 = vld [vmem:[%s3 + $0x38] sm:$0xf]
    %v168 = vld [vmem:[%s3 + $0x3c] sm:$0xf]
    %v169 = vld [vmem:[%s4] sm:$0x1]
    %v171 = vlaneseq
    %v172 = vshrl.u32 %v171, 7
    %v173 = vsub.s32 0, %v172
    %v174 = vrot.slane %v169, %v173
    %v192 = vunpack.c.l.b16 %v153
    %v193 = vunpack.c.l.b16 %v154
    %v194 = vunpack.c.l.b16 %v155
    %v195 = vunpack.c.l.b16 %v156
    %v196 = vunpack.c.l.b16 %v157
    %v197 = vunpack.c.l.b16 %v158
    %v198 = vunpack.c.l.b16 %v159
    %v199 = vunpack.c.l.b16 %v160
    %v200 = vunpack.c.l.b16 %v161
    %v201 = vunpack.c.l.b16 %v162
    %v202 = vunpack.c.l.b16 %v163
    %v203 = vunpack.c.l.b16 %v164
    %v204 = vunpack.c.l.b16 %v165
    %v205 = vunpack.c.l.b16 %v166
    %v206 = vunpack.c.l.b16 %v167
    %v207 = vunpack.c.l.b16 %v168
    %v208 = vpack.c.b16 %v193, %v192
    %v209 = vpack.c.b16 %v195, %v194
    %v210 = vpack.c.b16 %v197, %v196
    %v211 = vpack.c.b16 %v199, %v198
    %v212 = vpack.c.b16 %v201, %v200
    %v213 = vpack.c.b16 %v203, %v202
    %v214 = vpack.c.b16 %v205, %v204
    %v215 = vpack.c.b16 %v207, %v206
    %224 = vmatprep.subr.bf16.mxu0 0
    %225 = vmatpush1.bf16.msra.mxu0 %v208
    %226 = vmatprep.subr.bf16.mxu0 0
    %227 = vmatpush1.bf16.msra.mxu0 %v209
    %228 = vmatprep.subr.bf16.mxu0 0
    %229 = vmatpush1.bf16.msra.mxu0 %v210
    %230 = vmatprep.subr.bf16.mxu0 0
    %231 = vmatpush1.bf16.msra.mxu0 %v211
    %232 = vmatprep.subr.bf16.mxu0 0
    %233 = vmatpush1.bf16.msra.mxu0 %v212
    %234 = vmatprep.subr.bf16.mxu0 0
    %235 = vmatpush1.bf16.msra.mxu0 %v213
    %236 = vmatprep.subr.bf16.mxu0 0
    %237 = vmatpush1.bf16.msra.mxu0 %v214
    %238 = vmatprep.subr.bf16.mxu0 0
    %239 = vmatpush1.bf16.msra.mxu0 %v215
    %240 = vmatprep.subr.bf16.mxu0 0
    %241 = vmatpush1.bf16.msra.mxu0 0
    %242 = vmatprep.subr.bf16.mxu0 0
    %243 = vmatpush1.bf16.msra.mxu0 0
    %244 = vmatprep.subr.bf16.mxu0 0
    %245 = vmatpush1.bf16.msra.mxu0 0
    %246 = vmatprep.subr.bf16.mxu0 0
    %247 = vmatpush1.bf16.msra.mxu0 0
    %248 = vmatprep.subr.bf16.mxu0 0
    %249 = vmatpush1.bf16.msra.mxu0 0
    %250 = vmatprep.subr.bf16.mxu0 0
    %251 = vmatpush1.bf16.msra.mxu0 0
    %252 = vmatprep.subr.bf16.mxu0 0
    %253 = vmatpush1.bf16.msra.mxu0 0
    %254 = vmatprep.subr.bf16.mxu0 0
    %255 = vmatpush1.bf16.msra.mxu0 0
    %256 = vmatprep.mubr.bf16.mxu0 0
    %257 = vmatmul.mubr.bf16.gmra.mrb[0].mxu0 %v148
    %v258 = vpop.f32.mrb[0].mxu0
    %v259 = vadd.f32 %v174, %v258
    %v260 = vpop.f32.mrb[0].mxu0
    %v261 = vpop.f32.mrb[0].mxu0
    %v262 = vadd.f32 %v174, %v261
    %v263 = vpop.f32.mrb[0].mxu0
    %264 = vmatprep.mubr.bf16.mxu0 0
    %265 = vmatmul.mubr.bf16.gmra.mrb[0].mxu0 %v149
    %v266 = vpop.f32.mrb[0].mxu0
    %v267 = vadd.f32 %v174, %v266
    %v268 = vpop.f32.mrb[0].mxu0
    %v269 = vpop.f32.mrb[0].mxu0
    %v270 = vadd.f32 %v174, %v269
    %v271 = vpop.f32.mrb[0].mxu0
    %272 = vmatprep.mubr.bf16.mxu0 0
    %273 = vmatmul.mubr.bf16.gmra.mrb[0].mxu0 %v150
    %v274 = vpop.f32.mrb[0].mxu0
    %v275 = vadd.f32 %v174, %v274
    %v276 = vpop.f32.mrb[0].mxu0
    %v277 = vpop.f32.mrb[0].mxu0
    %v278 = vadd.f32 %v174, %v277
    %v279 = vpop.f32.mrb[0].mxu0
    %280 = vmatprep.mubr.bf16.mxu0 0
    %281 = vmatmul.mubr.bf16.gmra.mrb[0].mxu0 %v151
    %v282 = vpop.f32.mrb[0].mxu0
    %v283 = vadd.f32 %v174, %v282
    %v284 = vpop.f32.mrb[0].mxu0
    %v285 = vpop.f32.mrb[0].mxu0
    %v286 = vadd.f32 %v174, %v285
    %v287 = vpop.f32.mrb[0].mxu0
    %288 = vmatprep.mubr.bf16.mxu0 0
    %289 = vmatmul.mubr.bf16.gmra.mrb[0].mxu0 %v152
    %v290 = vpop.f32.mrb[0].mxu0
    %v291 = vadd.f32 %v174, %v290
    %v292 = vpop.f32.mrb[0].mxu0
    %v293 = vpop.f32.mrb[0].mxu0
    %v294 = vadd.f32 %v174, %v293
    %v295 = vpop.f32.mrb[0].mxu0
    %296 = vdwg.mxu0
    %v297 = vmax.f32 %v259, %v275
    %v298 = vmax.f32 %v262, %v278
    %v299 = vmax.f32 %v267, %v283
    %v300 = vmax.f32 %v270, %v286
    %v301 = vmax.f32 %v297, %v291
    %v302 = vmax.f32 %v298, %v294
    %v303 = vmax.f32 %v301, %v302
    %v304 = vmax.f32 %v299, %v300
    %v305 = vmax.f32 %v303, %v304
    %306 = vst [vmem:[#allocation2] sm:$0xff] %v305
    // Predicated region
    $region22: #{tpu_custom_call.1} parent=1 // pred_check
      _
    $region23: #{tpu_custom_call.1} parent=1 // pred_check_branch
      %308 = sbr.rel (0) target = $region25
    $region24: #{tpu_custom_call.1} parent=1 // pred_region
      %s310 = ssub.s32 128, 128
      %311 = vsyncadd [#allocation3], %s310
      %s313 = sshll.u32 [#allocation2], 4
      %s314 = int_to_ptr.vmem [resolvable:$true] %s313
      %316 = dma.vmem_to_hbm [thread:$0]  %s314, 128, %s5, [#allocation3]
    $region25: #{tpu_custom_call.1} parent=1 // pred_fallthru
      _
    // Predicated region
    $region26: #{tpu_custom_call.1} parent=1 // pred_check
      _
    $region27: #{tpu_custom_call.1} parent=1 // pred_check_branch
      %318 = sbr.rel (0) target = $region29
    $region28: #{tpu_custom_call.1} parent=1 // pred_region
      %319 = dma.done [#allocation3], 128
    $region29: #{tpu_custom_call.1} parent=1 // pred_fallthru
      _
    %320 = vsyncpa [#allocation3], 1

</llo_original>
